<compile_context>
chip_gen: v6e
topology: v6e:2x2x1
jax: 0.10.0
libtpu: 0.0.40
codegen_flags: <defaults>
</compile_context>

<pallas_src>
import functools

import jax
import jax.numpy as jnp
from jax.experimental import pallas as pl
from jax.experimental.pallas import tpu as pltpu


def _round_up(n: int, m: int) -> int:
    return ((n + m - 1) // m) * m


def _cdiv(a: int, b: int) -> int:
    return (a + b - 1) // b


def _default_tile_target() -> int:
    """Per-generation row-tile target (rows of x per grid step).

    v5e/v6e (128 MiB VMEM): 32768 rows -> 16 MiB per x buffer, ~4.3 MB of HBM
    traffic per step, far above the ~0.35 us fixed per-step overhead.
    v7x (64 MiB VMEM per TensorCore): 16384 rows -> 8 MiB per x buffer so the
    double-buffered block stays well inside the per-core budget.
    """
    try:
        vmem_bytes = pltpu.get_tpu_info().vmem_capacity_bytes
    except Exception:  # interpret mode / unknown chip -> conservative default
        return 16384
    return 16384 if vmem_bytes <= (64 << 20) else 32768


def _autoencoder_kernel(input_size, x_ref, wT_ref, b_ref, o_ref):
    """Per-tile hot path: decoder matmul + bias + row-wise inner product."""
    # Slice the Ref (not a loaded vreg value) so only the needed lanes are read.
    c = x_ref[:, :input_size]                  # encoder(.) == identity -> (T, k)
    p = x_ref[:, input_size:]                  # (T, input_size + 1)
    # decoder: Linear(input_size+1, k) -> p @ W^T + b   (MXU, f32 accumulate)
    d = jnp.dot(p, wT_ref[...], preferred_element_type=jnp.float32) + b_ref[...]
    # (c[:, None, :] @ d[:, :, None]).squeeze()  ==  row-wise <c, d>
    res = jnp.sum(c * d, axis=-1)              # (T,)
    # Lane-dense store: fold the per-row scalar into (T//128, 128) so the output
    # block uses full 128-lane stores and a dense writeback DMA.
    o_ref[...] = res.reshape(o_ref.shape)


def autoencoder_forward(x, w, b, input_size, *, tile_target=None):
    """Forward pass.

    x: (N, 2*input_size + 1) float32
    w: (k, input_size + 1) float32   (decoder weight, PyTorch layout)
    b: (k,) float32                  (decoder bias)
    Returns (N,) float32.

    Note: torch's .squeeze() on N == 1 would return a 0-d tensor; here the
    result is always shape (N,).
    """
    x = x.astype(jnp.float32)
    w = w.astype(jnp.float32)
    b = b.astype(jnp.float32)

    N = x.shape[0]
    k = w.shape[0]
    feat = x.shape[1]
    assert feat == 2 * input_size + 1, "x must have 2*input_size+1 columns"
    assert w.shape == (k, input_size + 1), "decoder weight shape mismatch"
    assert b.shape == (k,), "decoder bias shape mismatch"
    # Encoder is modeled as identity -> its output width must match k.
    assert k == input_size, (
        "encoder is identity; k must equal input_size for the row-wise "
        "inner product to be well defined"
    )

    if tile_target is None:
        tile_target = _default_tile_target()
    tile_target = min(max(1024, _round_up(tile_target, 1024)), 1 << 17)

    n_steps = _cdiv(N, tile_target)
    if n_steps == 1 and N >= 2048:
        n_steps = 2  # pipeline DMA/compute and feed both v7x TensorCores

    if n_steps == 1:
        # Tiny batch: a single 128-row-aligned block. jnp.pad copies x, but the
        # whole array is <= tile_target rows here so the copy is negligible.
        tile_n = max(128, _round_up(N, 128))
        if tile_n != N:
            x = jnp.pad(x, ((0, tile_n - N), (0, 0)))
        n_x_rows = tile_n
    else:
        # Balanced tiles, multiple of 1024 rows (keeps the (tile_n//128, 128)
        # output block's leading dim a multiple of 8 sublanes). No jnp.pad:
        # Pallas handles the ragged last block, avoiding a full HBM copy of x.
        # Garbage rows beyond N only affect outputs that are sliced off below.
        tile_n = _round_up(_cdiv(N, n_steps), 1024)
        n_x_rows = N

    grid = (_cdiv(n_x_rows, tile_n),)
    out_rows = grid[0] * (tile_n // 128)       # every output block fully in-bounds

    # x block pads 33 -> 128 lanes in VMEM; budget for double buffering + headroom.
    x_block_bytes = tile_n * 128 * 4
    o_block_bytes = (tile_n // 128) * 128 * 4
    vmem_limit = max(32 << 20, 2 * (x_block_bytes + o_block_bytes) + (8 << 20))

    cost = pl.CostEstimate(
        flops=2 * N * (input_size + 1) * k + 3 * N * k,
        transcendentals=0,
        bytes_accessed=(N * feat + N + k * (input_size + 1) + k) * 4,
    )

    out = pl.pallas_call(
        functools.partial(_autoencoder_kernel, input_size),
        out_shape=jax.ShapeDtypeStruct((out_rows, 128), jnp.float32),
        grid=grid,
        in_specs=[
            # x: tiled over rows, full feature width per block.
            pl.BlockSpec((tile_n, feat), lambda i: (i, 0)),
            # W^T (input_size+1, k): tiny, resident / replicated across the grid.
            pl.BlockSpec((input_size + 1, k), lambda i: (0, 0)),
            # bias (1, k): tiny, resident / replicated.
            pl.BlockSpec((1, k), lambda i: (0, 0)),
        ],
        out_specs=pl.BlockSpec((tile_n // 128, 128), lambda i: (i, 0)),
        compiler_params=pltpu.CompilerParams(
            dimension_semantics=("parallel",),   # shard rows across v7x's 2 TCs
            vmem_limit_bytes=vmem_limit,
        ),
        cost_estimate=cost,
    )(x, w.T, b.reshape(1, k))

    return out.reshape(out_rows * 128)[:N]


def _reference(x, w, b, input_size):
    c = x[:, :input_size]
    p = x[:, input_size:]
    d = p @ w.T + b
    return jnp.sum(c * d, axis=-1)


if __name__ == "__main__":
    input_size = 16
    k = 16          # encoder is identity => k must equal input_size

    key = jax.random.PRNGKey(0)
    kx, kw, kb = jax.random.split(key, 3)

    # Deterministic PyTorch-Linear-style init: U(-1/sqrt(fan_in), 1/sqrt(fan_in))
    fan_in = input_size + 1
    bound = 1.0 / jnp.sqrt(jnp.float32(fan_in))
    w = jax.random.uniform(kw, (k, fan_in), jnp.float32, -bound, bound)
    b = jax.random.uniform(kb, (k,), jnp.float32, -bound, bound)

    # 1) Tiny batch (single padded block, grid = 1).
    N = 8
    x = jax.random.normal(kx, (N, 2 * input_size + 1), dtype=jnp.float32)
    out = jax.block_until_ready(autoencoder_forward(x, w, b, input_size))
    assert out.shape == (N,)
    assert jnp.allclose(out, _reference(x, w, b, input_size), atol=1e-5, rtol=1e-5)

    # 2) Multi-step ragged path (no jnp.pad), small explicit tile target.
    N2 = 3000
    x2 = jax.random.normal(jax.random.PRNGKey(1), (N2, 2 * input_size + 1),
                           dtype=jnp.float32)
    out2 = jax.block_until_ready(
        autoencoder_forward(x2, w, b, input_size, tile_target=1024))
    assert out2.shape == (N2,)
    assert jnp.allclose(out2, _reference(x2, w, b, input_size),
                        atol=1e-5, rtol=1e-5)

    # 3) Mid-size batch with the generation-default tile (auto-split into >=2 steps).
    N3 = 2500
    x3 = jax.random.normal(jax.random.PRNGKey(2), (N3, 2 * input_size + 1),
                           dtype=jnp.float32)
    out3 = jax.block_until_ready(autoencoder_forward(x3, w, b, input_size))
    assert out3.shape == (N3,)
    assert jnp.allclose(out3, _reference(x3, w, b, input_size),
                        atol=1e-5, rtol=1e-5)

    print("KERNEL_OK")
</pallas_src>

<mosaic_0001>
module attributes {stable_mosaic.version = 11 : i64} {
  func.func @_autoencoder_kernel(%arg0: i32, %arg1: memref<128x33xf32, #tpu.memory_space<vmem>>, %arg2: memref<17x16xf32, #tpu.memory_space<vmem>>, %arg3: memref<1x16xf32, #tpu.memory_space<vmem>>, %arg4: memref<1x128xf32, #tpu.memory_space<vmem>>) attributes {dimension_semantics = [#tpu.dimension_semantics<parallel>], iteration_bounds = array<i64: 1>, scalar_prefetch = 0 : i64, scratch_operands = 0 : i64, tpu.core_type = #tpu.core_type<tc>, window_params = [{transform_indices = @transform_0, window_bounds = array<i64: 128, 33>}, {pipeline_mode = #tpu.pipeline_mode<synchronous>, transform_indices = @transform_1, window_bounds = array<i64: 17, 16>}, {pipeline_mode = #tpu.pipeline_mode<synchronous>, transform_indices = @transform_2, window_bounds = array<i64: 1, 16>}, {transform_indices = @transform_3, window_bounds = array<i64: 1, 128>}]} {
    %c0 = arith.constant 0 : index
    %c0_0 = arith.constant 0 : index
    %0 = vector.load %arg1[%c0, %c0_0] : memref<128x33xf32, #tpu.memory_space<vmem>>, vector<128x16xf32>
    %c0_1 = arith.constant 0 : index
    %c16 = arith.constant 16 : index
    %1 = vector.load %arg1[%c0_1, %c16] : memref<128x33xf32, #tpu.memory_space<vmem>>, vector<128x17xf32>
    %c0_2 = arith.constant 0 : index
    %c0_3 = arith.constant 0 : index
    %2 = vector.load %arg2[%c0_2, %c0_3] : memref<17x16xf32, #tpu.memory_space<vmem>>, vector<17x16xf32>
    %cst = arith.constant dense<0.000000e+00> : vector<128x16xf32>
    %3 = tpu.matmul %1, %2, %cst {dimension_numbers = #tpu.dot_dimension_numbers<[1], [0], [0], [1], [0, 0, 1, 1], [], []>} : vector<128x17xf32>, vector<17x16xf32>, vector<128x16xf32> -> vector<128x16xf32>
    %c0_4 = arith.constant 0 : index
    %c0_5 = arith.constant 0 : index
    %4 = vector.load %arg3[%c0_4, %c0_5] : memref<1x16xf32, #tpu.memory_space<vmem>>, vector<1x16xf32>
    %5 = vector.broadcast %4 : vector<1x16xf32> to vector<128x16xf32>
    %6 = arith.addf %3, %5 : vector<128x16xf32>
    %7 = arith.mulf %0, %6 : vector<128x16xf32>
    %cst_6 = arith.constant dense<0.000000e+00> : vector<128xf32>
    %8 = vector.multi_reduction <add>, %7, %cst_6 [1] : vector<128x16xf32> to vector<128xf32>
    %9 = vector.shape_cast %8 : vector<128xf32> to vector<1x128xf32>
    %c0_7 = arith.constant 0 : index
    %c0_8 = arith.constant 0 : index
    %10 = vector.load %arg4[%c0_7, %c0_8] : memref<1x128xf32, #tpu.memory_space<vmem>>, vector<1x128xf32>
    tpu.vector_store %arg4[%c0_7, %c0_8], %9 {strides = array<i32>} : memref<1x128xf32, #tpu.memory_space<vmem>>, vector<1x128xf32>,
    return
  }
  func.func @transform_0(%arg0: i32) -> (i32, i32) {
    %c0_i32 = arith.constant 0 : i32
    %c0_i32_0 = arith.constant 0 : i32
    return %arg0, %c0_i32 : i32, i32
  }
  func.func @transform_1(%arg0: i32) -> (i32, i32) {
    %c0_i32 = arith.constant 0 : i32
    %c0_i32_0 = arith.constant 0 : i32
    %c0_i32_1 = arith.constant 0 : i32
    return %c0_i32, %c0_i32_0 : i32, i32
  }
  func.func @transform_2(%arg0: i32) -> (i32, i32) {
    %c0_i32 = arith.constant 0 : i32
    %c0_i32_0 = arith.constant 0 : i32
    %c0_i32_1 = arith.constant 0 : i32
    return %c0_i32, %c0_i32_0 : i32, i32
  }
  func.func @transform_3(%arg0: i32) -> (i32, i32) {
    %c0_i32 = arith.constant 0 : i32
    %c0_i32_0 = arith.constant 0 : i32
    return %arg0, %c0_i32 : i32, i32
  }
}

</mosaic_0001>

<llo_original>
// kernel: tpu_custom_call.1
$region0: #{tpu_custom_call.1}
  #allocation0 [shape = 'u32[]', space=smem, size = 0x4, offset = 0x4, fixed_abs, tag = 'smem constant byte address 0x4 - core index']
  #allocation1 [shape = 'u32[144,128]{1,0:T(1,128)}', space=vmem, size = 0x12000, scoped, tag = 'internal scratch']
  %s0 = inlined_call_operand.vmem [shape: f32[128,33], index: 0, kind: input, shape index: {}]
  %s1 = inlined_call_operand.vmem [shape: f32[17,16], index: 1, kind: input, shape index: {}]
  %s2 = inlined_call_operand.vmem [shape: f32[1,16], index: 2, kind: input, shape index: {}]
  %s3 = inlined_call_operand.hbm [shape: f32[1,128], index: 3, kind: output, shape index: {}]
  %s4 = sld [smem:[#allocation0]]
  $region22: #{tpu_custom_call.1} parent=0
    _
  %s6 = ssub.s32 1, %s4
  %s7 = scalar_select 0, %s6, %s4
  $region1: #{tpu_custom_call.1} parent=0
    #allocation2 [shape = 'u8[512]{0}', space=vmem, size = 0x400, scoped, tag = 'output window, operand 0, single buffered']
    #allocation3 [shape = 's32[1]{0}', space=sflag, size = 0x4, scoped, tag = 'scoped memory for tpu_custom_call.1']
    %8 = vsyncpa [#allocation3], 0
    // Predicated region
    $region2: #{tpu_custom_call.1} parent=1 // pred_check
      _
    $region3: #{tpu_custom_call.1} parent=1 // pred_check_branch
      %10 = sbr.rel (0) target = $region5
    $region4: #{tpu_custom_call.1} parent=1 // pred_region
      _
    $region5: #{tpu_custom_call.1} parent=1 // pred_fallthru
      _
    // Predicated region
    $region6: #{tpu_custom_call.1} parent=1 // pred_check
      _
    $region7: #{tpu_custom_call.1} parent=1 // pred_check_branch
      %12 = sbr.rel (0) target = $region9
    $region8: #{tpu_custom_call.1} parent=1 // pred_region
      _
    $region9: #{tpu_custom_call.1} parent=1 // pred_fallthru
      _
    // Predicated region
    $region10: #{tpu_custom_call.1} parent=1 // pred_check
      _
    $region11: #{tpu_custom_call.1} parent=1 // pred_check_branch
      %14 = sbr.rel (0) target = $region13
    $region12: #{tpu_custom_call.1} parent=1 // pred_region
      _
    $region13: #{tpu_custom_call.1} parent=1 // pred_fallthru
      _
    %v15 = vld [vmem:[%s0] sm:$0xff]
    %v16 = vld [vmem:[%s0 + $0x8] sm:$0xff]
    %v17 = vld [vmem:[%s0 + $0x10] sm:$0xff]
    %v18 = vld [vmem:[%s0 + $0x18] sm:$0xff]
    %v19 = vld [vmem:[%s0 + $0x20] sm:$0xff]
    %v20 = vld [vmem:[%s0 + $0x28] sm:$0xff]
    %v21 = vld [vmem:[%s0 + $0x30] sm:$0xff]
    %v22 = vld [vmem:[%s0 + $0x38] sm:$0xff]
    %v23 = vld [vmem:[%s0 + $0x40] sm:$0xff]
    %v24 = vld [vmem:[%s0 + $0x48] sm:$0xff]
    %v25 = vld [vmem:[%s0 + $0x50] sm:$0xff]
    %v26 = vld [vmem:[%s0 + $0x58] sm:$0xff]
    %v27 = vld [vmem:[%s0 + $0x60] sm:$0xff]
    %v28 = vld [vmem:[%s0 + $0x68] sm:$0xff]
    %v29 = vld [vmem:[%s0 + $0x70] sm:$0xff]
    %v30 = vld [vmem:[%s0 + $0x78] sm:$0xff]
    %v31 = vld [vmem:[%s1] sm:$0xff]
    %v32 = vld [vmem:[%s1 + $0x8] sm:$0xff]
    %v33 = vld [vmem:[%s1 + $0x10] sm:$0x1]
    %v34 = vld [vmem:[%s2] sm:$0x1]
    %v36 = vlaneseq
    %v37 = vshrl.u32 %v36, 7
    %v38 = vsub.s32 0, %v37
    %v39 = vrot.slane %v34, %v38
    %57 = vrot.lane.b32.xlu0 %v15, 112
    %v58 = vpop.permute.xlu0 %57
    %59 = vrot.lane.b32.xlu0 %v16, 112
    %v60 = vpop.permute.xlu0 %59
    %61 = vrot.lane.b32.xlu0 %v17, 112
    %v62 = vpop.permute.xlu0 %61
    %63 = vrot.lane.b32.xlu0 %v18, 112
    %v64 = vpop.permute.xlu0 %63
    %65 = vrot.lane.b32.xlu0 %v19, 112
    %v66 = vpop.permute.xlu0 %65
    %67 = vrot.lane.b32.xlu0 %v20, 112
    %v68 = vpop.permute.xlu0 %67
    %69 = vrot.lane.b32.xlu0 %v21, 112
    %v70 = vpop.permute.xlu0 %69
    %71 = vrot.lane.b32.xlu0 %v22, 112
    %v72 = vpop.permute.xlu0 %71
    %73 = vrot.lane.b32.xlu0 %v23, 112
    %v74 = vpop.permute.xlu0 %73
    %75 = vrot.lane.b32.xlu0 %v24, 112
    %v76 = vpop.permute.xlu0 %75
    %77 = vrot.lane.b32.xlu0 %v25, 112
    %v78 = vpop.permute.xlu0 %77
    %79 = vrot.lane.b32.xlu0 %v26, 112
    %v80 = vpop.permute.xlu0 %79
    %81 = vrot.lane.b32.xlu0 %v27, 112
    %v82 = vpop.permute.xlu0 %81
    %83 = vrot.lane.b32.xlu0 %v28, 112
    %v84 = vpop.permute.xlu0 %83
    %85 = vrot.lane.b32.xlu0 %v29, 112
    %v86 = vpop.permute.xlu0 %85
    %87 = vrot.lane.b32.xlu0 %v30, 112
    %v88 = vpop.permute.xlu0 %87
    %vm89 = vcmask 138240
    %v90 = vsel %vm89, %v58, 0
    %v92 = vsel %vm89, %v60, 0
    %v94 = vsel %vm89, %v62, 0
    %v96 = vsel %vm89, %v64, 0
    %v98 = vsel %vm89, %v66, 0
    %v100 = vsel %vm89, %v68, 0
    %v102 = vsel %vm89, %v70, 0
    %v104 = vsel %vm89, %v72, 0
    %v106 = vsel %vm89, %v74, 0
    %v108 = vsel %vm89, %v76, 0
    %v110 = vsel %vm89, %v78, 0
    %v112 = vsel %vm89, %v80, 0
    %v114 = vsel %vm89, %v82, 0
    %v116 = vsel %vm89, %v84, 0
    %v118 = vsel %vm89, %v86, 0
    %v120 = vsel %vm89, %v88, 0
    %vm122 = vcmask 1040384
    %v124 = vsel %vm122, %v33, 0
    %126 = vmatprep.subr.mxu0 0.0
    %127 = vmatpush1.msra.mxu0 0.0
    %128 = vmatprep.subr.mxu0 0.0
    %129 = vmatpush1.msra.mxu0 0.0
    %130 = vmatprep.subr.mxu0 0.0
    %131 = vmatpush1.msra.mxu0 0.0
    %132 = vmatprep.subr.mxu0 0.0
    %133 = vmatpush1.msra.mxu0 0.0
    %134 = vmatprep.subr.mxu0 0.0
    %135 = vmatpush1.msra.mxu0 0.0
    %136 = vmatprep.subr.mxu0 0.0
    %137 = vmatpush1.msra.mxu0 0.0
    %138 = vmatprep.subr.mxu0 0.0
    %139 = vmatpush1.msra.mxu0 0.0
    %140 = vmatprep.subr.mxu0 0.0
    %141 = vmatpush1.msra.mxu0 0.0
    %142 = vmatprep.subr.mxu0 0.0
    %143 = vmatpush1.msra.mxu0 0.0
    %144 = vmatprep.subr.mxu0 0.0
    %145 = vmatpush1.msra.mxu0 0.0
    %146 = vmatprep.subr.mxu0 0.0
    %147 = vmatpush1.msra.mxu0 0.0
    %148 = vmatprep.subr.mxu0 0.0
    %149 = vmatpush1.msra.mxu0 0.0
    %150 = vmatprep.subr.mxu0 0.0
    %151 = vmatpush1.msra.mxu0 0.0
    %152 = vmatprep.subr.mxu0 0.0
    %153 = vmatpush1.msra.mxu0 %v124
    %154 = vmatprep.subr.mxu0 0.0
    %155 = vmatpush1.msra.mxu0 %v32
    %156 = vmatprep.subr.mxu0 0.0
    %157 = vmatpush1.msra.mxu0 %v31
    %158 = vmatprep.subr.mxu0 0.0
    %159 = vmatpush2.msra.mxu0 0.0
    %160 = vmatprep.subr.mxu0 0.0
    %161 = vmatpush2.msra.mxu0 0.0
    %162 = vmatprep.subr.mxu0 0.0
    %163 = vmatpush2.msra.mxu0 0.0
    %164 = vmatprep.subr.mxu0 0.0
    %165 = vmatpush2.msra.mxu0 0.0
    %166 = vmatprep.subr.mxu0 0.0
    %167 = vmatpush2.msra.mxu0 0.0
    %168 = vmatprep.subr.mxu0 0.0
    %169 = vmatpush2.msra.mxu0 0.0
    %170 = vmatprep.subr.mxu0 0.0
    %171 = vmatpush2.msra.mxu0 0.0
    %172 = vmatprep.subr.mxu0 0.0
    %173 = vmatpush2.msra.mxu0 0.0
    %174 = vmatprep.subr.mxu0 0.0
    %175 = vmatpush2.msra.mxu0 0.0
    %176 = vmatprep.subr.mxu0 0.0
    %177 = vmatpush2.msra.mxu0 0.0
    %178 = vmatprep.subr.mxu0 0.0
    %179 = vmatpush2.msra.mxu0 0.0
    %180 = vmatprep.subr.mxu0 0.0
    %181 = vmatpush2.msra.mxu0 0.0
    %182 = vmatprep.subr.mxu0 0.0
    %183 = vmatpush2.msra.mxu0 0.0
    %184 = vmatprep.subr.mxu0 0.0
    %185 = vmatpush2.msra.mxu0 0.0
    %186 = vmatprep.subr.mxu0 0.0
    %187 = vmatpush2.msra.mxu0 0.0
    %188 = vmatprep.subr.mxu0 0.0
    %189 = vmatpush2.msra.mxu0 0.0
    %190 = vmatprep.mubr.f32.mxu0 0.0
    %191 = vmatmul.mubr.f32.gmra.mxu0 %v90
    %v192 = vpop.f32.mrf.mxu0
    %v193 = vadd.f32 %v39, %v192
    %v194 = vpop.f32.mrf.mxu0
    %195 = vmatprep.mubr.f32.mxu0 0.0
    %196 = vmatmul.mubr.f32.gmra.mxu0 %v92
    %v197 = vpop.f32.mrf.mxu0
    %v198 = vadd.f32 %v39, %v197
    %v199 = vpop.f32.mrf.mxu0
    %200 = vmatprep.mubr.f32.mxu0 0.0
    %201 = vmatmul.mubr.f32.gmra.mxu0 %v94
    %v202 = vpop.f32.mrf.mxu0
    %v203 = vadd.f32 %v39, %v202
    %v204 = vpop.f32.mrf.mxu0
    %205 = vmatprep.mubr.f32.mxu0 0.0
    %206 = vmatmul.mubr.f32.gmra.mxu0 %v96
    %v207 = vpop.f32.mrf.mxu0
    %v208 = vadd.f32 %v39, %v207
    %v209 = vpop.f32.mrf.mxu0
    %210 = vmatprep.mubr.f32.mxu0 0.0
    %211 = vmatmul.mubr.f32.gmra.mxu0 %v98
    %v212 = vpop.f32.mrf.mxu0
    %v213 = vadd.f32 %v39, %v212
    %v214 = vpop.f32.mrf.mxu0
    %215 = vmatprep.mubr.f32.mxu0 0.0
    %216 = vmatmul.mubr.f32.gmra.mxu0 %v100
    %v217 = vpop.f32.mrf.mxu0
    %v218 = vadd.f32 %v39, %v217
    %v219 = vpop.f32.mrf.mxu0
    %220 = vmatprep.mubr.f32.mxu0 0.0
    %221 = vmatmul.mubr.f32.gmra.mxu0 %v102
    %v222 = vpop.f32.mrf.mxu0
    %v223 = vadd.f32 %v39, %v222
    %v224 = vpop.f32.mrf.mxu0
    %225 = vmatprep.mubr.f32.mxu0 0.0
    %226 = vmatmul.mubr.f32.gmra.mxu0 %v104
    %v227 = vpop.f32.mrf.mxu0
    %v228 = vadd.f32 %v39, %v227
    %v229 = vpop.f32.mrf.mxu0
    %230 = vmatprep.mubr.f32.mxu0 0.0
    %231 = vmatmul.mubr.f32.gmra.mxu0 %v106
    %v232 = vpop.f32.mrf.mxu0
    %v233 = vadd.f32 %v39, %v232
    %v234 = vpop.f32.mrf.mxu0
    %235 = vmatprep.mubr.f32.mxu0 0.0
    %236 = vmatmul.mubr.f32.gmra.mxu0 %v108
    %v237 = vpop.f32.mrf.mxu0
    %v238 = vadd.f32 %v39, %v237
    %v239 = vpop.f32.mrf.mxu0
    %240 = vmatprep.mubr.f32.mxu0 0.0
    %241 = vmatmul.mubr.f32.gmra.mxu0 %v110
    %v242 = vpop.f32.mrf.mxu0
    %v243 = vadd.f32 %v39, %v242
    %v244 = vpop.f32.mrf.mxu0
    %245 = vmatprep.mubr.f32.mxu0 0.0
    %246 = vmatmul.mubr.f32.gmra.mxu0 %v112
    %v247 = vpop.f32.mrf.mxu0
    %v248 = vadd.f32 %v39, %v247
    %v249 = vpop.f32.mrf.mxu0
    %250 = vmatprep.mubr.f32.mxu0 0.0
    %251 = vmatmul.mubr.f32.gmra.mxu0 %v114
    %v252 = vpop.f32.mrf.mxu0
    %v253 = vadd.f32 %v39, %v252
    %v254 = vpop.f32.mrf.mxu0
    %255 = vmatprep.mubr.f32.mxu0 0.0
    %256 = vmatmul.mubr.f32.gmra.mxu0 %v116
    %v257 = vpop.f32.mrf.mxu0
    %v258 = vadd.f32 %v39, %v257
    %v259 = vpop.f32.mrf.mxu0
    %260 = vmatprep.mubr.f32.mxu0 0.0
    %261 = vmatmul.mubr.f32.gmra.mxu0 %v118
    %v262 = vpop.f32.mrf.mxu0
    %v263 = vadd.f32 %v39, %v262
    %v264 = vpop.f32.mrf.mxu0
    %265 = vmatprep.mubr.f32.mxu0 0.0
    %266 = vmatmul.mubr.f32.gmra.mxu0 %v120
    %v267 = vpop.f32.mrf.mxu0
    %v268 = vadd.f32 %v39, %v267
    %v269 = vpop.f32.mrf.mxu0
    %270 = vdwg.mxu0
    %v271 = vmul.f32 %v15, %v193
    %v272 = vmul.f32 %v16, %v198
    %v273 = vmul.f32 %v17, %v203
    %v274 = vmul.f32 %v18, %v208
    %v275 = vmul.f32 %v19, %v213
    %v276 = vmul.f32 %v20, %v218
    %v277 = vmul.f32 %v21, %v223
    %v278 = vmul.f32 %v22, %v228
    %v279 = vmul.f32 %v23, %v233
    %v280 = vmul.f32 %v24, %v238
    %v281 = vmul.f32 %v25, %v243
    %v282 = vmul.f32 %v26, %v248
    %v283 = vmul.f32 %v27, %v253
    %v284 = vmul.f32 %v28, %v258
    %v285 = vmul.f32 %v29, %v263
    %v286 = vmul.f32 %v30, %v268
    %vm287 = vcmask 130048
    %v288 = vsel %vm287, %v271, 0.0
    %289 = vadd.xlane.f32.xlu0 %v288
    %v290 = vpop.xlane.xlu0 %289
    %v291 = vsel %vm287, %v272, 0.0
    %292 = vadd.xlane.f32.xlu0 %v291
    %v293 = vpop.xlane.xlu0 %292
    %v294 = vsel %vm287, %v273, 0.0
    %295 = vadd.xlane.f32.xlu0 %v294
    %v296 = vpop.xlane.xlu0 %295
    %v297 = vsel %vm287, %v274, 0.0
    %298 = vadd.xlane.f32.xlu0 %v297
    %v299 = vpop.xlane.xlu0 %298
    %v300 = vsel %vm287, %v275, 0.0
    %301 = vadd.xlane.f32.xlu0 %v300
    %v302 = vpop.xlane.xlu0 %301
    %v303 = vsel %vm287, %v276, 0.0
    %304 = vadd.xlane.f32.xlu0 %v303
    %v305 = vpop.xlane.xlu0 %304
    %v306 = vsel %vm287, %v277, 0.0
    %307 = vadd.xlane.f32.xlu0 %v306
    %v308 = vpop.xlane.xlu0 %307
    %v309 = vsel %vm287, %v278, 0.0
    %310 = vadd.xlane.f32.xlu0 %v309
    %v311 = vpop.xlane.xlu0 %310
    %v312 = vsel %vm287, %v279, 0.0
    %313 = vadd.xlane.f32.xlu0 %v312
    %v314 = vpop.xlane.xlu0 %313
    %v315 = vsel %vm287, %v280, 0.0
    %316 = vadd.xlane.f32.xlu0 %v315
    %v317 = vpop.xlane.xlu0 %316
    %v318 = vsel %vm287, %v281, 0.0
    %319 = vadd.xlane.f32.xlu0 %v318
    %v320 = vpop.xlane.xlu0 %319
    %v321 = vsel %vm287, %v282, 0.0
    %322 = vadd.xlane.f32.xlu0 %v321
    %v323 = vpop.xlane.xlu0 %322
    %v324 = vsel %vm287, %v283, 0.0
    %325 = vadd.xlane.f32.xlu0 %v324
    %v326 = vpop.xlane.xlu0 %325
    %v327 = vsel %vm287, %v284, 0.0
    %328 = vadd.xlane.f32.xlu0 %v327
    %v329 = vpop.xlane.xlu0 %328
    %v330 = vsel %vm287, %v285, 0.0
    %331 = vadd.xlane.f32.xlu0 %v330
    %v332 = vpop.xlane.xlu0 %331
    %v333 = vsel %vm287, %v286, 0.0
    %334 = vadd.xlane.f32.xlu0 %v333
    %v335 = vpop.xlane.xlu0 %334
    %v352 = vlaneseq
    %v353 = vand.u32 %v352, 127
    %v354 = vlaneseq
    %v355 = vshrl.u32 %v354, 7
    %v356 = vsub.s32 %v353, %v355
    %v357 = vrot.slane %v290, %v356
    %v358 = vadd.s32 %v353, 4294967288
    %v359 = vlaneseq
    %v360 = vshrl.u32 %v359, 7
    %v361 = vsub.s32 %v358, %v360
    %v362 = vrot.slane %v293, %v361
    %vm363 = vcmask 130112
    %v364 = vsel %vm363, %v362, %v357
    %v365 = vadd.s32 %v353, 4294967280
    %v366 = vlaneseq
    %v367 = vshrl.u32 %v366, 7
    %v368 = vsub.s32 %v365, %v367
    %v369 = vrot.slane %v296, %v368
    %vm370 = vcmask 195712
    %v371 = vsel %vm370, %v369, %v364
    %v372 = vadd.s32 %v353, 4294967272
    %v373 = vlaneseq
    %v374 = vshrl.u32 %v373, 7
    %v375 = vsub.s32 %v372, %v374
    %v376 = vrot.slane %v299, %v375
    %vm377 = vcmask 261312
    %v378 = vsel %vm377, %v376, %v371
    %v379 = vadd.s32 %v353, 4294967264
    %v380 = vlaneseq
    %v381 = vshrl.u32 %v380, 7
    %v382 = vsub.s32 %v379, %v381
    %v383 = vrot.slane %v302, %v382
    %vm384 = vcmask 326912
    %v385 = vsel %vm384, %v383, %v378
    %v386 = vadd.s32 %v353, 4294967256
    %v387 = vlaneseq
    %v388 = vshrl.u32 %v387, 7
    %v389 = vsub.s32 %v386, %v388
    %v390 = vrot.slane %v305, %v389
    %vm391 = vcmask 392512
    %v392 = vsel %vm391, %v390, %v385
    %v393 = vadd.s32 %v353, 4294967248
    %v394 = vlaneseq
    %v395 = vshrl.u32 %v394, 7
    %v396 = vsub.s32 %v393, %v395
    %v397 = vrot.slane %v308, %v396
    %vm398 = vcmask 458112
    %v399 = vsel %vm398, %v397, %v392
    %v400 = vadd.s32 %v353, 4294967240
    %v401 = vlaneseq
    %v402 = vshrl.u32 %v401, 7
    %v403 = vsub.s32 %v400, %v402
    %v404 = vrot.slane %v311, %v403
    %vm405 = vcmask 523712
    %v406 = vsel %vm405, %v404, %v399
    %v407 = vadd.s32 %v353, 4294967232
    %v408 = vlaneseq
    %v409 = vshrl.u32 %v408, 7
    %v410 = vsub.s32 %v407, %v409
    %v411 = vrot.slane %v314, %v410
    %vm412 = vcmask 589312
    %v413 = vsel %vm412, %v411, %v406
    %v414 = vadd.s32 %v353, 4294967224
    %v415 = vlaneseq
    %v416 = vshrl.u32 %v415, 7
    %v417 = vsub.s32 %v414, %v416
    %v418 = vrot.slane %v317, %v417
    %vm419 = vcmask 654912
    %v420 = vsel %vm419, %v418, %v413
    %v421 = vadd.s32 %v353, 4294967216
    %v422 = vlaneseq
    %v423 = vshrl.u32 %v422, 7
    %v424 = vsub.s32 %v421, %v423
    %v425 = vrot.slane %v320, %v424
    %vm426 = vcmask 720512
    %v427 = vsel %vm426, %v425, %v420
    %v428 = vadd.s32 %v353, 4294967208
    %v429 = vlaneseq
    %v430 = vshrl.u32 %v429, 7
    %v431 = vsub.s32 %v428, %v430
    %v432 = vrot.slane %v323, %v431
    %vm433 = vcmask 786112
    %v434 = vsel %vm433, %v432, %v427
    %v435 = vadd.s32 %v353, 4294967200
    %v436 = vlaneseq
    %v437 = vshrl.u32 %v436, 7
    %v438 = vsub.s32 %v435, %v437
    %v439 = vrot.slane %v326, %v438
    %vm440 = vcmask 851712
    %v441 = vsel %vm440, %v439, %v434
    %v442 = vadd.s32 %v353, 4294967192
    %v443 = vlaneseq
    %v444 = vshrl.u32 %v443, 7
    %v445 = vsub.s32 %v442, %v444
    %v446 = vrot.slane %v329, %v445
    %vm447 = vcmask 917312
    %v448 = vsel %vm447, %v446, %v441
    %v449 = vadd.s32 %v353, 4294967184
    %v450 = vlaneseq
    %v451 = vshrl.u32 %v450, 7
    %v452 = vsub.s32 %v449, %v451
    %v453 = vrot.slane %v332, %v452
    %vm454 = vcmask 982912
    %v455 = vsel %vm454, %v453, %v448
    %v456 = vadd.s32 %v353, 4294967176
    %v457 = vlaneseq
    %v458 = vshrl.u32 %v457, 7
    %v459 = vsub.s32 %v456, %v458
    %v460 = vrot.slane %v335, %v459
    %vm461 = vcmask 1048512
    %v462 = vsel %vm461, %v460, %v455
    %464 = vst [vmem:[#allocation2] sm:$0x1] %v462
    // Predicated region
    $region14: #{tpu_custom_call.1} parent=1 // pred_check
      _
    $region15: #{tpu_custom_call.1} parent=1 // pred_check_branch
      %466 = sbr.rel (0) target = $region17
    $region16: #{tpu_custom_call.1} parent=1 // pred_region
      %s468 = ssub.s32 16, 16
      %469 = vsyncadd [#allocation3], %s468
      %s471 = sshll.u32 [#allocation2], 4
      %s472 = int_to_ptr.vmem [resolvable:$true] %s471
      %474 = dma.vmem_to_hbm [thread:$0]  %s472, 16, %s3, [#allocation3]
    $region17: #{tpu_custom_call.1} parent=1 // pred_fallthru
      _
    // Predicated region
    $region18: #{tpu_custom_call.1} parent=1 // pred_check
      _
    $region19: #{tpu_custom_call.1} parent=1 // pred_check_branch
      %476 = sbr.rel (0) target = $region21
    $region20: #{tpu_custom_call.1} parent=1 // pred_region
      %477 = dma.done [#allocation3], 16
    $region21: #{tpu_custom_call.1} parent=1 // pred_fallthru
      _
    %478 = vsyncpa [#allocation3], 1

</llo_original>
